<compile_context>
chip_gen: v5e
topology: v5e:2x2
jax: 0.10.0
libtpu: 0.0.40
codegen_flags: <defaults>
</compile_context>

<pallas_src>
import functools
import math

import jax
import jax.numpy as jnp
from jax import lax
from jax.experimental import pallas as pl
from jax.experimental.pallas import tpu as pltpu

SOFTMAX_TEMP = 3.0
_CLIP_LO = 0.01
_CLIP_HI = 0.99


def _js_div_kernel(x1_ref, x2_ref, out_ref, *,
                   inv_temp: float, batch: int, tile_rows: int,
                   mask_rows: bool, transposed: bool):
    x1 = x1_ref[...].astype(jnp.float32)
    x2 = x2_ref[...].astype(jnp.float32)

    if transposed:
        # Put the batch dim on the 128-lane axis so exp/log operate on fully
        # packed vregs when num_classes < 128. The transpose is XLU work,
        # which has slack in this kernel.
        x1 = x1.T
        x2 = x2.T
        red_axis = 0      # class axis (sublanes)
    else:
        red_axis = 1      # class axis (lanes)

    x1 = x1 * inv_temp
    x2 = x2 * inv_temp

    def softmax_and_logsoftmax(x):
        mx = jnp.max(x, axis=red_axis, keepdims=True)
        xs = x - mx
        e = jnp.exp(xs)                                # 1 exp / element (EUP)
        s = jnp.sum(e, axis=red_axis, keepdims=True)
        p = e * pl.reciprocal(s, approx=False)
        logp = xs - jnp.log(s)                         # per-row log only
        return p, logp

    p1, logp1 = softmax_and_logsoftmax(x1)
    p2, logp2 = softmax_and_logsoftmax(x2)

    # log(clip(p, lo, hi)) == clip(log p, log lo, log hi): log is monotone.
    log_lo = math.log(_CLIP_LO)
    log_hi = math.log(_CLIP_HI)
    logp1c = jnp.clip(logp1, log_lo, log_hi)
    logp2c = jnp.clip(logp2, log_lo, log_hi)

    mc = jnp.clip(0.5 * (p1 + p2), _CLIP_LO, _CLIP_HI)
    log_mc = jnp.log(mc)                               # 1 log / element (EUP)

    # Fused KL pair: kl1 + kl2 = sum(mc * (2*log_mc - logp1c - logp2c)).
    contrib = mc * (2.0 * log_mc - logp1c - logp2c)

    if mask_rows:
        # Ragged last block: rows beyond `batch` hold garbage. Exclude them
        # with a select (garbage / NaN never propagates through jnp.where).
        if transposed:
            idx = lax.broadcasted_iota(jnp.int32, (1, tile_rows), 1)
        else:
            idx = lax.broadcasted_iota(jnp.int32, (tile_rows, 1), 0)
        idx = idx + pl.program_id(0) * tile_rows
        contrib = jnp.where(idx < batch, contrib, 0.0)

    # Per-tile partial sum; final 0.5/B scale and clamp happen in the wrapper.
    out_ref[...] = jnp.sum(contrib, keepdims=True)


def _round_up(n: int, m: int) -> int:
    return ((n + m - 1) // m) * m


def _vmem_limit_bytes() -> int:
    """Generation-aware scoped-VMEM limit (3/4 of physical, capped at 96MiB)."""
    cap = None
    try:
        cap = int(pltpu.get_tpu_info().vmem_capacity_bytes)
    except Exception:
        cap = None
    if not cap or cap <= 0:
        cap = 64 * 1024 * 1024       # conservative (v7x-sized) fallback
    return int(min(cap * 3 // 4, 96 * 1024 * 1024))


def _pick_tile_rows(batch: int, num_classes: int, itemsize: int,
                    vmem_budget_bytes: int) -> int:
    row_mult = {1: 32, 2: 16}.get(itemsize, 8)
    # Resident VMEM per tile row: 2 inputs x 2 pipeline buffers (input dtype)
    # plus ~8 live f32 elementwise temporaries. (Temporaries are not 8 extra
    # double-buffered tiles — only what the compiler keeps live.)
    bytes_per_row = num_classes * (2 * 2 * itemsize + 8 * 4)
    vmem_rows = max(row_mult, vmem_budget_bytes // bytes_per_row)
    # Target ~6 MiB of input HBM traffic per grid step (both operands) so the
    # ~0.35us fixed per-step overhead is well amortized.
    traffic_rows = max(row_mult,
                       (6 * 1024 * 1024) // (2 * num_classes * itemsize))
    tb = min(vmem_rows, traffic_rows)
    # Keep >= ~4 grid steps when the batch allows: overlaps DMA with compute
    # and gives both v7x TensorCores work on the "parallel" batch axis.
    tb = min(tb, _round_up(pl.cdiv(batch, 4), row_mult))
    tb = min(tb, _round_up(batch, row_mult))
    if tb >= 128:
        tb = (tb // 128) * 128       # lane-aligned after in-kernel transpose
    else:
        tb = _round_up(tb, row_mult)
    return max(row_mult, tb)


def jenson_shannon_div(output_first, output_second,
                       softmax_temp: float = SOFTMAX_TEMP,
                       tile_rows=None, compute_layout: str = "auto"):
    """Pallas TPU implementation of JensonShannonDiv.forward.

    Args:
      output_first, output_second: (B, C) logits from two networks. Any float
        dtype; bf16 inputs halve HBM traffic, math is f32 in-kernel.
      tile_rows: optional batch-tile override.
      compute_layout: "auto" | "rows" | "transposed" — in-kernel compute
        layout ("transposed" packs the batch dim onto the 128-lane axis).
    Returns:
      scalar float32 loss.
    """
    assert output_first.shape == output_second.shape and output_first.ndim == 2
    if output_first.dtype != output_second.dtype:
        dt = jnp.promote_types(output_first.dtype, output_second.dtype)
        output_first = output_first.astype(dt)
        output_second = output_second.astype(dt)

    batch, num_classes = output_first.shape
    itemsize = jnp.dtype(output_first.dtype).itemsize
    row_mult = {1: 32, 2: 16}.get(itemsize, 8)

    vmem_limit = _vmem_limit_bytes()
    if tile_rows is not None:
        tb = _round_up(int(tile_rows), row_mult)
    else:
        tb = _pick_tile_rows(batch, num_classes, itemsize,
                             int(vmem_limit * 0.75))

    num_blocks = pl.cdiv(batch, tb)
    mask_rows = (batch % tb) != 0     # ragged last block (no wrapper padding)

    if compute_layout == "transposed":
        transposed = True
    elif compute_layout == "rows":
        transposed = False
    else:  # auto
        transposed = (num_classes < 128 and num_classes % 8 == 0 and tb >= 128)

    kernel = functools.partial(
        _js_div_kernel,
        inv_temp=1.0 / softmax_temp,
        batch=batch,
        tile_rows=tb,
        mask_rows=mask_rows,
        transposed=transposed,
    )

    partials = pl.pallas_call(
        kernel,
        out_shape=jax.ShapeDtypeStruct((num_blocks, 1), jnp.float32),
        grid_spec=pltpu.PrefetchScalarGridSpec(
            num_scalar_prefetch=0,
            grid=(num_blocks,),
            in_specs=[
                pl.BlockSpec((tb, num_classes), lambda i: (i, 0)),
                pl.BlockSpec((tb, num_classes), lambda i: (i, 0)),
            ],
            out_specs=pl.BlockSpec((1, 1), lambda i: (i, 0)),
        ),
        compiler_params=pltpu.CompilerParams(
            dimension_semantics=("parallel",),
            vmem_limit_bytes=vmem_limit,
        ),
    )(output_first, output_second)

    # Final batchmean scale (real batch, not padded), 0.5 factor and clamp.
    return jnp.clip(jnp.sum(partials) * (0.5 / batch), 0.0, 1.0)


def _reference(x1, x2, softmax_temp=SOFTMAX_TEMP):
    p1 = jax.nn.softmax(x1.astype(jnp.float32) / softmax_temp, axis=1)
    p2 = jax.nn.softmax(x2.astype(jnp.float32) / softmax_temp, axis=1)
    m = 0.5 * (p1 + p2)
    p1c = jnp.clip(p1, _CLIP_LO, _CLIP_HI)
    p2c = jnp.clip(p2, _CLIP_LO, _CLIP_HI)
    mc = jnp.clip(m, _CLIP_LO, _CLIP_HI)
    b = x1.shape[0]
    kl1 = jnp.sum(mc * (jnp.log(mc) - jnp.log(p1c))) / b
    kl2 = jnp.sum(mc * (jnp.log(mc) - jnp.log(p2c))) / b
    return jnp.clip(0.5 * (kl1 + kl2), 0.0, 1.0)


def _check(name, x1, x2, **kw):
    got = jax.block_until_ready(jenson_shannon_div(x1, x2, **kw))
    ref = _reference(x1, x2)
    assert jnp.allclose(got, ref, atol=1e-5, rtol=1e-5), (name, got, ref)


if __name__ == "__main__":
    key = jax.random.PRNGKey(0)
    ks = jax.random.split(key, 10)

    # 1) Classifier-style logits, single tile, row-major compute path.
    x1 = jax.random.normal(ks[0], (8, 32), dtype=jnp.float32) * 2.0
    x2 = jax.random.normal(ks[1], (8, 32), dtype=jnp.float32) * 2.0
    _check("small", x1, x2)

    # 2) Ragged grid (no wrapper pad) + row mask, multiple parallel partials.
    y1 = jax.random.normal(ks[2], (20, 32), dtype=jnp.float32) * 2.0
    y2 = jax.random.normal(ks[3], (20, 32), dtype=jnp.float32) * 2.0
    _check("ragged_rows", y1, y2, tile_rows=8)

    # 3) Transposed (lane-packed) compute path, 2 parallel blocks, no mask.
    z1 = jax.random.normal(ks[4], (256, 32), dtype=jnp.float32) * 2.0
    z2 = jax.random.normal(ks[5], (256, 32), dtype=jnp.float32) * 2.0
    _check("transposed", z1, z2, tile_rows=128)

    # 4) Transposed compute path with a ragged last block.
    w1 = jax.random.normal(ks[6], (200, 32), dtype=jnp.float32) * 2.0
    w2 = jax.random.normal(ks[7], (200, 32), dtype=jnp.float32) * 2.0
    _check("transposed_ragged", w1, w2, tile_rows=128)

    # 5) bf16 logits (halved HBM traffic path), 16-row tile multiple, ragged.
    b1 = (jax.random.normal(ks[8], (24, 48), dtype=jnp.float32) * 2.0
          ).astype(jnp.bfloat16)
    b2 = (jax.random.normal(ks[9], (24, 48), dtype=jnp.float32) * 2.0
          ).astype(jnp.bfloat16)
    _check("bf16", b1, b2)

    print("KERNEL_OK")
</pallas_src>

<mosaic_0001>
module attributes {stable_mosaic.version = 11 : i64} {
  func.func @_js_div_kernel(%arg0: i32, %arg1: memref<8x32xf32, #tpu.memory_space<vmem>>, %arg2: memref<8x32xf32, #tpu.memory_space<vmem>>, %arg3: memref<1x1xf32, #tpu.memory_space<vmem>>) attributes {dimension_semantics = [#tpu.dimension_semantics<parallel>], iteration_bounds = array<i64: 1>, scalar_prefetch = 0 : i64, scratch_operands = 0 : i64, tpu.core_type = #tpu.core_type<tc>, window_params = [{transform_indices = @transform_0, window_bounds = array<i64: 8, 32>}, {transform_indices = @transform_1, window_bounds = array<i64: 8, 32>}, {transform_indices = @transform_2, window_bounds = array<i64: 1, 1>}]} {
    %c0 = arith.constant 0 : index
    %c0_0 = arith.constant 0 : index
    %0 = vector.load %arg1[%c0, %c0_0] : memref<8x32xf32, #tpu.memory_space<vmem>>, vector<8x32xf32>
    %c0_1 = arith.constant 0 : index
    %c0_2 = arith.constant 0 : index
    %1 = vector.load %arg2[%c0_1, %c0_2] : memref<8x32xf32, #tpu.memory_space<vmem>>, vector<8x32xf32>
    %cst = arith.constant 0.333333343 : f32
    %2 = vector.broadcast %cst : f32 to vector<8x32xf32>
    %3 = arith.mulf %0, %2 : vector<8x32xf32>
    %cst_3 = arith.constant 0.333333343 : f32
    %4 = vector.broadcast %cst_3 : f32 to vector<8x32xf32>
    %5 = arith.mulf %1, %4 : vector<8x32xf32>
    %cst_4 = arith.constant dense<0xFF800000> : vector<8xf32>
    %6 = vector.multi_reduction <maximumf>, %3, %cst_4 [1] : vector<8x32xf32> to vector<8xf32>
    %7 = vector.shape_cast %6 : vector<8xf32> to vector<8x1xf32>
    %8 = vector.broadcast %7 : vector<8x1xf32> to vector<8x32xf32>
    %9 = arith.subf %3, %8 : vector<8x32xf32>
    %10 = math.exp %9 : vector<8x32xf32>
    %cst_5 = arith.constant dense<0.000000e+00> : vector<8xf32>
    %11 = vector.multi_reduction <add>, %10, %cst_5 [1] : vector<8x32xf32> to vector<8xf32>
    %12 = vector.shape_cast %11 : vector<8xf32> to vector<8x1xf32>
    %13 = tpu.reciprocal %12 : vector<8x1xf32> -> vector<8x1xf32>
    %14 = vector.broadcast %13 : vector<8x1xf32> to vector<8x32xf32>
    %15 = arith.mulf %10, %14 : vector<8x32xf32>
    %16 = math.log %12 : vector<8x1xf32>
    %17 = vector.broadcast %16 : vector<8x1xf32> to vector<8x32xf32>
    %18 = arith.subf %9, %17 : vector<8x32xf32>
    %cst_6 = arith.constant dense<0xFF800000> : vector<8xf32>
    %19 = vector.multi_reduction <maximumf>, %5, %cst_6 [1] : vector<8x32xf32> to vector<8xf32>
    %20 = vector.shape_cast %19 : vector<8xf32> to vector<8x1xf32>
    %21 = vector.broadcast %20 : vector<8x1xf32> to vector<8x32xf32>
    %22 = arith.subf %5, %21 : vector<8x32xf32>
    %23 = math.exp %22 : vector<8x32xf32>
    %cst_7 = arith.constant dense<0.000000e+00> : vector<8xf32>
    %24 = vector.multi_reduction <add>, %23, %cst_7 [1] : vector<8x32xf32> to vector<8xf32>
    %25 = vector.shape_cast %24 : vector<8xf32> to vector<8x1xf32>
    %26 = tpu.reciprocal %25 : vector<8x1xf32> -> vector<8x1xf32>
    %27 = vector.broadcast %26 : vector<8x1xf32> to vector<8x32xf32>
    %28 = arith.mulf %23, %27 : vector<8x32xf32>
    %29 = math.log %25 : vector<8x1xf32>
    %30 = vector.broadcast %29 : vector<8x1xf32> to vector<8x32xf32>
    %31 = arith.subf %22, %30 : vector<8x32xf32>
    %cst_8 = arith.constant -4.60517025 : f32
    %cst_9 = arith.constant -0.0100503359 : f32
    %32 = vector.broadcast %cst_8 : f32 to vector<8x32xf32>
    %33 = arith.maximumf %32, %18 : vector<8x32xf32>
    %34 = vector.broadcast %cst_9 : f32 to vector<8x32xf32>
    %35 = arith.minimumf %34, %33 : vector<8x32xf32>
    %cst_10 = arith.constant -4.60517025 : f32
    %cst_11 = arith.constant -0.0100503359 : f32
    %36 = vector.broadcast %cst_10 : f32 to vector<8x32xf32>
    %37 = arith.maximumf %36, %31 : vector<8x32xf32>
    %38 = vector.broadcast %cst_11 : f32 to vector<8x32xf32>
    %39 = arith.minimumf %38, %37 : vector<8x32xf32>
    %40 = arith.addf %15, %28 : vector<8x32xf32>
    %cst_12 = arith.constant 5.000000e-01 : f32
    %41 = vector.broadcast %cst_12 : f32 to vector<8x32xf32>
    %42 = arith.mulf %41, %40 : vector<8x32xf32>
    %cst_13 = arith.constant 0.00999999977 : f32
    %cst_14 = arith.constant 9.900000e-01 : f32
    %43 = vector.broadcast %cst_13 : f32 to vector<8x32xf32>
    %44 = arith.maximumf %43, %42 : vector<8x32xf32>
    %45 = vector.broadcast %cst_14 : f32 to vector<8x32xf32>
    %46 = arith.minimumf %45, %44 : vector<8x32xf32>
    %47 = math.log %46 : vector<8x32xf32>
    %cst_15 = arith.constant 2.000000e+00 : f32
    %48 = vector.broadcast %cst_15 : f32 to vector<8x32xf32>
    %49 = arith.mulf %48, %47 : vector<8x32xf32>
    %50 = arith.subf %49, %35 : vector<8x32xf32>
    %51 = arith.subf %50, %39 : vector<8x32xf32>
    %52 = arith.mulf %46, %51 : vector<8x32xf32>
    %53 = vector.shape_cast %52 : vector<8x32xf32> to vector<1x8x32xf32>
    %cst_16 = arith.constant dense<0.000000e+00> : vector<1xf32>
    %54 = vector.multi_reduction <add>, %53, %cst_16 [1, 2] : vector<1x8x32xf32> to vector<1xf32>
    %55 = vector.shape_cast %54 : vector<1xf32> to vector<1x1x1xf32>
    %56 = vector.extract %55[0, 0, 0] : f32 from vector<1x1x1xf32>
    %57 = vector.broadcast %56 : f32 to vector<1x1xf32>
    %c0_17 = arith.constant 0 : index
    %c0_18 = arith.constant 0 : index
    %58 = vector.load %arg3[%c0_17, %c0_18] : memref<1x1xf32, #tpu.memory_space<vmem>>, vector<1x1xf32>
    tpu.vector_store %arg3[%c0_17, %c0_18], %57 {strides = array<i32>} : memref<1x1xf32, #tpu.memory_space<vmem>>, vector<1x1xf32>,
    return
  }
  func.func @transform_0(%arg0: i32) -> (i32, i32) {
    %c0_i32 = arith.constant 0 : i32
    %c0_i32_0 = arith.constant 0 : i32
    return %arg0, %c0_i32 : i32, i32
  }
  func.func @transform_1(%arg0: i32) -> (i32, i32) {
    %c0_i32 = arith.constant 0 : i32
    %c0_i32_0 = arith.constant 0 : i32
    return %arg0, %c0_i32 : i32, i32
  }
  func.func @transform_2(%arg0: i32) -> (i32, i32) {
    %c0_i32 = arith.constant 0 : i32
    %c0_i32_0 = arith.constant 0 : i32
    return %arg0, %c0_i32 : i32, i32
  }
}

</mosaic_0001>

<llo_original>
// kernel: tpu_custom_call.1
$region0: #{tpu_custom_call.1}
  #allocation0 [shape = 'u32[]', space=smem, size = 0x4, offset = 0x4, fixed_abs, tag = 'smem constant byte address 0x4 - core index']
  #allocation1 [shape = 'u32[72,128]{1,0:T(1,128)}', space=vmem, size = 0x9000, scoped, tag = 'internal scratch']
  %s0 = inlined_call_operand.hbm [shape: f32[8,32], index: 0, kind: input, shape index: {}]
  %s1 = inlined_call_operand.hbm [shape: f32[8,32], index: 1, kind: input, shape index: {}]
  %s2 = inlined_call_operand.hbm [shape: f32[1,1], index: 2, kind: output, shape index: {}]
  %s3 = sld [smem:[#allocation0]]
  $region26: #{tpu_custom_call.1} parent=0
    _
  %s5 = ssub.s32 1, %s3
  %s6 = scalar_select 0, %s5, %s3
  $region1: #{tpu_custom_call.1} parent=0
    #allocation2 [shape = 'u8[4096]{0}', space=vmem, size = 0x1000, scoped, tag = 'input window, operand 0, single buffered']
    #allocation3 [shape = 's32[1]{0}', space=sflag, size = 0x4, scoped, tag = 'scoped memory for tpu_custom_call.1']
    #allocation4 [shape = 's32[1]{0}', space=sflag, size = 0x4, scoped, tag = 'scoped memory for tpu_custom_call.1']
    #allocation5 [shape = 'u8[4096]{0}', space=vmem, size = 0x1000, scoped, tag = 'input window, operand 1, single buffered']
    #allocation6 [shape = 's32[1]{0}', space=sflag, size = 0x4, scoped, tag = 'scoped memory for tpu_custom_call.1']
    #allocation7 [shape = 'u8[512]{0}', space=vmem, size = 0x400, scoped, tag = 'output window, operand 0, single buffered']
    %7 = vsyncpa [#allocation3], 0
    %8 = vsyncpa [#allocation6], 0
    %9 = vsyncpa [#allocation4], 0
    // Predicated region
    $region2: #{tpu_custom_call.1} parent=1 // pred_check
      _
    $region3: #{tpu_custom_call.1} parent=1 // pred_check_branch
      %11 = sbr.rel (0) target = $region5
    $region4: #{tpu_custom_call.1} parent=1 // pred_region
      %13 = vsyncadd [#allocation3], 0
      %s15 = sshll.u32 %s0, 4
      %s16 = int_to_ptr.hbm [resolvable:$true] %s15
      %s17 = sshll.u32 [#allocation2], 4
      %s18 = int_to_ptr.vmem [resolvable:$true] %s17
      %20 = dma.hbm_to_vmem [thread:$0]  %s16, 128, %s18, [#allocation3]
    $region5: #{tpu_custom_call.1} parent=1 // pred_fallthru
      _
    // Predicated region
    $region6: #{tpu_custom_call.1} parent=1 // pred_check
      _
    $region7: #{tpu_custom_call.1} parent=1 // pred_check_branch
      %22 = sbr.rel (0) target = $region9
    $region8: #{tpu_custom_call.1} parent=1 // pred_region
      %24 = vsyncadd [#allocation6], 0
      %s26 = sshll.u32 %s1, 4
      %s27 = int_to_ptr.hbm [resolvable:$true] %s26
      %s28 = sshll.u32 [#allocation5], 4
      %s29 = int_to_ptr.vmem [resolvable:$true] %s28
      %31 = dma.hbm_to_vmem [thread:$0]  %s27, 128, %s29, [#allocation6]
    $region9: #{tpu_custom_call.1} parent=1 // pred_fallthru
      _
    // Predicated region
    $region10: #{tpu_custom_call.1} parent=1 // pred_check
      _
    $region11: #{tpu_custom_call.1} parent=1 // pred_check_branch
      %33 = sbr.rel (0) target = $region13
    $region12: #{tpu_custom_call.1} parent=1 // pred_region
      %35 = dma.done [#allocation3], 128
    $region13: #{tpu_custom_call.1} parent=1 // pred_fallthru
      _
    // Predicated region
    $region14: #{tpu_custom_call.1} parent=1 // pred_check
      _
    $region15: #{tpu_custom_call.1} parent=1 // pred_check_branch
      %37 = sbr.rel (0) target = $region17
    $region16: #{tpu_custom_call.1} parent=1 // pred_region
      %39 = dma.done [#allocation6], 128
    $region17: #{tpu_custom_call.1} parent=1 // pred_fallthru
      _
    %v40 = vld [vmem:[#allocation2] sm:$0xff]
    %v41 = vld [vmem:[#allocation5] sm:$0xff]
    %v42 = vmul.f32 %v40, 0.33333334
    %v43 = vmul.f32 %v41, 0.33333334
    %vm44 = vcmask 261120
    %v45 = vsel %vm44, %v42, -inf
    %46 = vmax.xlane.f32.xlu0 %v45
    %v47 = vpop.xlane.xlu0 %46
    %v48 = vsub.f32 %v42, %v47
    %v49 = vmul.f32 %v48, 1.442695
    %v50 = vpow.pop %v49
    %v51 = vsel %vm44, %v50, 0.0
    %52 = vadd.xlane.f32.xlu0 %v51
    %v53 = vpop.xlane.xlu0 %52
    %v54 = vrcp.pop %v53
    %v55 = vmul.f32 %v53, %v54
    %v56 = vsub.f32 1.0, %v55
    %v57 = vmul.f32 %v54, %v56
    %v58 = vadd.f32 %v54, %v57
    %vm59 = vweird.f32 %v53
    %vm60 = vweird.f32 %v54
    %vm61 = vmor %vm59, %vm60
    %v62 = vsel %vm61, %v54, %v58
    %v63 = vand.u32 2147483647, %v53
    %vm64 = vcmp.eq.f32.partialorder %v63, 8.507059e+37
    %v65 = vand.u32 %v53, 2147483648
    %v66 = vor.u32 1.1754944e-38, %v65
    %v67 = vsel %vm64, %v66, %v62
    %v68 = vmul.f32 %v50, %v67
    %v69 = vlog2.pop %v53
    %v70 = vmul.f32 %v69, 0.6931472
    %v71 = vsub.f32 %v48, %v70
    %v72 = vsel %vm44, %v43, -inf
    %73 = vmax.xlane.f32.xlu0 %v72
    %v74 = vpop.xlane.xlu0 %73
    %v75 = vsub.f32 %v43, %v74
    %v76 = vmul.f32 %v75, 1.442695
    %v77 = vpow.pop %v76
    %v78 = vsel %vm44, %v77, 0.0
    %79 = vadd.xlane.f32.xlu0 %v78
    %v80 = vpop.xlane.xlu0 %79
    %v81 = vrcp.pop %v80
    %v82 = vmul.f32 %v80, %v81
    %v83 = vsub.f32 1.0, %v82
    %v84 = vmul.f32 %v81, %v83
    %v85 = vadd.f32 %v81, %v84
    %vm86 = vweird.f32 %v80
    %vm87 = vweird.f32 %v81
    %vm88 = vmor %vm86, %vm87
    %v89 = vsel %vm88, %v81, %v85
    %v90 = vand.u32 2147483647, %v80
    %vm91 = vcmp.eq.f32.partialorder %v90, 8.507059e+37
    %v92 = vand.u32 %v80, 2147483648
    %v93 = vor.u32 1.1754944e-38, %v92
    %v94 = vsel %vm91, %v93, %v89
    %v95 = vmul.f32 %v77, %v94
    %v96 = vlog2.pop %v80
    %v97 = vmul.f32 %v96, 0.6931472
    %v98 = vsub.f32 %v75, %v97
    %v99 = vmax.f32 %v71, -4.6051702
    %v100 = vmin.f32 %v99, -0.010050336
    %v101 = vmax.f32 %v98, -4.6051702
    %v102 = vmin.f32 %v101, -0.010050336
    %v103 = vadd.f32 %v68, %v95
    %v104 = vmul.f32 %v103, 0.5
    %v105 = vmax.f32 %v104, 0.01
    %v106 = vmin.f32 %v105, 0.99
    %v107 = vlog2.pop %v106
    %v108 = vmul.f32 %v107, 0.6931472
    %v109 = vmul.f32 %v108, 2.0
    %v110 = vsub.f32 %v109, %v100
    %v111 = vsub.f32 %v110, %v102
    %v112 = vmul.f32 %v106, %v111
    %v113 = vsel %vm44, %v112, 0.0
    %114 = vadd.xlane.f32.xlu0 %v113
    %v115 = vpop.xlane.xlu0 %114
    %v116 = vrot.slane %v115, 4
    %v117 = vadd.f32 %v115, %v116
    %v118 = vrot.slane %v117, 2
    %v119 = vadd.f32 %v117, %v118
    %v120 = vrot.slane %v119, 1
    %v121 = vadd.f32 %v119, %v120
    %s122 = vtos %v121
    %v123 = vstv %s122
    %vm124 = vcmask 0
    %125 = vst.msk [vmem:[#allocation7] sm:$0x1] %vm124, %v123
    // Predicated region
    $region18: #{tpu_custom_call.1} parent=1 // pred_check
      _
    $region19: #{tpu_custom_call.1} parent=1 // pred_check_branch
      %127 = sbr.rel (0) target = $region21
    $region20: #{tpu_custom_call.1} parent=1 // pred_region
      %129 = vsyncadd [#allocation4], 0
      %s131 = sshll.u32 [#allocation7], 4
      %s132 = int_to_ptr.vmem [resolvable:$true] %s131
      %s133 = sshll.u32 %s2, 4
      %s134 = int_to_ptr.hbm [resolvable:$true] %s133
      %136 = dma.vmem_to_hbm [thread:$0]  %s132, 16, %s134, [#allocation4]
    $region21: #{tpu_custom_call.1} parent=1 // pred_fallthru
      _
    // Predicated region
    $region22: #{tpu_custom_call.1} parent=1 // pred_check
      _
    $region23: #{tpu_custom_call.1} parent=1 // pred_check_branch
      %138 = sbr.rel (0) target = $region25
    $region24: #{tpu_custom_call.1} parent=1 // pred_region
      %140 = dma.done [#allocation4], 16
    $region25: #{tpu_custom_call.1} parent=1 // pred_fallthru
      _
    %141 = vsyncpa [#allocation3], 1
    %142 = vsyncpa [#allocation6], 1
    %143 = vsyncpa [#allocation4], 1

</llo_original>
